<compile_context>
chip_gen: v7x
topology: tpu7x:2x2x1
jax: 0.10.0
libtpu: 0.0.40
codegen_flags: <defaults>
</compile_context>

<pallas_src>
import functools

import jax
import jax.numpy as jnp
from jax.experimental import pallas as pl
from jax.experimental.pallas import tpu as pltpu


# ----------------------------- kernels ------------------------------------- #

def _fb_eval_kernel(x_ref, w_ref, b_ref, o_ref):
    # x: (tile_b, F); w: (F, S) canonical (K, N); b: (1, S)
    y = jnp.dot(x_ref[...], w_ref[...], preferred_element_type=jnp.float32)
    y = y + b_ref[...].astype(jnp.float32)
    o_ref[...] = jnp.maximum(y, 0.0).astype(o_ref.dtype)


def _fb_train_kernel(x_ref, bits_ref, w_ref, b_ref, o_ref, *, keep_threshold):
    # bits: (tile_b, F) uniform uint8; keep with prob (256 - t)/256 ~= 1 - p.
    # Widen to i32 before the compare (cheap VPU unpack, robust lowering).
    keep = bits_ref[...].astype(jnp.int32) >= keep_threshold
    x = jnp.where(keep, x_ref[...], 0.0)          # 1/(1-p) scale folded into w
    y = jnp.dot(x, w_ref[...], preferred_element_type=jnp.float32)
    y = y + b_ref[...].astype(jnp.float32)
    o_ref[...] = jnp.maximum(y, 0.0).astype(o_ref.dtype)


# ----------------------------- wrapper -------------------------------------- #

def prepare_fb_params(weight, bias):
    """One-time, init-time param prep.

    weight: PyTorch-layout (stage_num, fc_size) -> canonical (fc_size, stage_num).
    bias:   (stage_num,)                        -> (1, stage_num).
    """
    weight = jnp.asarray(weight)
    bias = jnp.asarray(bias)
    return weight.T, bias.reshape(1, -1)


def _choose_tile_b(B, max_tile_b=4096):
    """Pick the batch tile.

    Mem-bound kernel: take the biggest tile that fits comfortably in VMEM
    (4096 rows of f32 x + uint8 bits + out is ~1.5 MiB double-buffered), but
    split into >= 2 grid steps once B is big enough so the 'parallel' batch
    axis can shard over v7x's two TensorCores.  Tile is a multiple of 32
    sublanes so the packed uint8 mask tiles cleanly too.
    """
    if B <= 64:
        return B                                    # single full-array block
    half = ((B + 1) // 2 + 31) // 32 * 32           # ceil(B/2) -> mult of 32
    return min(max_tile_b, half)


def fb_stream1_pb(x, weight_t, bias2, *, training=False, drop_p=0.2, rng=None):
    """Dropout(p) -> Linear -> ReLU.

    x:        (B, fc_size)
    weight_t: (fc_size, stage_num)   -- from prepare_fb_params (init-time)
    bias2:    (1, stage_num)         -- from prepare_fb_params (init-time)
    """
    B, F = x.shape
    Fw, S = weight_t.shape
    assert Fw == F, "weight_t must be (fc_size, stage_num)"

    tile_b = _choose_tile_b(B)
    grid = (pl.cdiv(B, tile_b),)

    in_specs = [pl.BlockSpec((tile_b, F), lambda i: (i, 0))]
    args = [x]

    if training and drop_p > 0.0:
        assert 0.0 < drop_p < 1.0, "drop_p must be in (0, 1) for training"
        if rng is None:
            rng = jax.random.PRNGKey(0)
        # uint8 mask stream: 4x less HBM traffic than int32 bits.
        bits = jax.random.bits(rng, (B, F), dtype=jnp.uint8)
        in_specs.append(pl.BlockSpec((tile_b, F), lambda i: (i, 0)))
        args.append(bits)
        keep_threshold = min(255, int(round(drop_p * 256)))   # keep prob ~= 1 - p
        # Fold the 1/(1-p) inverted-dropout scale into the tiny (F, S) weight
        # (one XLA op over F*S elements per call; removes a per-element VPU mul
        # over the full (tile_b, F) activation tile in the kernel).
        weight_t = weight_t * (1.0 / (1.0 - drop_p))
        kernel = functools.partial(_fb_train_kernel, keep_threshold=keep_threshold)
    else:
        kernel = _fb_eval_kernel

    # Weight and bias: same block every grid step -> stay VMEM-resident.
    in_specs += [
        pl.BlockSpec((F, S), lambda i: (0, 0)),
        pl.BlockSpec((1, S), lambda i: (0, 0)),
    ]
    args += [weight_t, bias2]

    return pl.pallas_call(
        kernel,
        out_shape=jax.ShapeDtypeStruct((B, S), x.dtype),   # unpadded output
        grid_spec=pltpu.PrefetchScalarGridSpec(
            num_scalar_prefetch=0,
            grid=grid,
            in_specs=in_specs,
            out_specs=pl.BlockSpec((tile_b, S), lambda i: (i, 0)),
        ),
        compiler_params=pltpu.CompilerParams(
            dimension_semantics=("parallel",),
        ),
    )(*args)


# ------------------------------ test ---------------------------------------- #

if __name__ == "__main__":
    # Shapes consistent with the module: fc_size=32, stage_num=8, batch=2.
    fc_size, stage_num, batch = 32, 8, 2
    drop_p = 0.2

    key = jax.random.PRNGKey(0)
    kx, kw, kb, kd = jax.random.split(key, 4)

    x = jax.random.normal(kx, (batch, fc_size), dtype=jnp.float32)

    # Deterministic params mimicking nn.Linear's uniform(-1/sqrt(fan_in), ...).
    bound = 1.0 / jnp.sqrt(jnp.float32(fc_size))
    weight = jax.random.uniform(kw, (stage_num, fc_size), dtype=jnp.float32,
                                minval=-bound, maxval=bound)
    bias = jax.random.uniform(kb, (stage_num,), dtype=jnp.float32,
                              minval=-bound, maxval=bound)

    # One-time (init-time) layout prep: transpose weight, 2-D bias.
    weight_t, bias2 = prepare_fb_params(weight, bias)

    # --- eval mode (dropout is identity) ---
    out = jax.block_until_ready(
        fb_stream1_pb(x, weight_t, bias2, training=False))
    ref = jnp.maximum(x @ weight.T + bias, 0.0)
    assert out.shape == (batch, stage_num)
    assert jnp.allclose(out, ref, atol=1e-5, rtol=1e-5), "eval mismatch vs reference"

    # --- training mode (inverted dropout) ---
    out_tr = jax.block_until_ready(
        fb_stream1_pb(x, weight_t, bias2, training=True, drop_p=drop_p, rng=kd))
    # Reference recomputes the same mask from the same key / threshold.
    bits = jax.random.bits(kd, (batch, fc_size), dtype=jnp.uint8)
    keep_threshold = min(255, int(round(drop_p * 256)))
    keep = bits.astype(jnp.int32) >= keep_threshold
    scale = 1.0 / (1.0 - drop_p)
    ref_tr = jnp.maximum(jnp.where(keep, x, 0.0) @ (weight.T * scale) + bias, 0.0)
    assert out_tr.shape == (batch, stage_num)
    assert jnp.allclose(out_tr, ref_tr, atol=1e-4, rtol=1e-4), "train mismatch vs reference"

    print("KERNEL_OK")
</pallas_src>

<mosaic_0001>
module attributes {stable_mosaic.version = 11 : i64} {
  func.func @_fb_eval_kernel(%arg0: i32, %arg1: memref<2x32xf32, #tpu.memory_space<vmem>>, %arg2: memref<32x8xf32, #tpu.memory_space<vmem>>, %arg3: memref<1x8xf32, #tpu.memory_space<vmem>>, %arg4: memref<2x8xf32, #tpu.memory_space<vmem>>) attributes {dimension_semantics = [#tpu.dimension_semantics<parallel>], iteration_bounds = array<i64: 1>, scalar_prefetch = 0 : i64, scratch_operands = 0 : i64, tpu.core_type = #tpu.core_type<tc>, window_params = [{transform_indices = @transform_0, window_bounds = array<i64: 2, 32>}, {pipeline_mode = #tpu.pipeline_mode<synchronous>, transform_indices = @transform_1, window_bounds = array<i64: 32, 8>}, {pipeline_mode = #tpu.pipeline_mode<synchronous>, transform_indices = @transform_2, window_bounds = array<i64: 1, 8>}, {transform_indices = @transform_3, window_bounds = array<i64: 2, 8>}]} {
    %c0 = arith.constant 0 : index
    %c0_0 = arith.constant 0 : index
    %0 = vector.load %arg1[%c0, %c0_0] : memref<2x32xf32, #tpu.memory_space<vmem>>, vector<2x32xf32>
    %c0_1 = arith.constant 0 : index
    %c0_2 = arith.constant 0 : index
    %1 = vector.load %arg2[%c0_1, %c0_2] : memref<32x8xf32, #tpu.memory_space<vmem>>, vector<32x8xf32>
    %cst = arith.constant dense<0.000000e+00> : vector<2x8xf32>
    %2 = tpu.matmul %0, %1, %cst {dimension_numbers = #tpu.dot_dimension_numbers<[1], [0], [0], [1], [0, 0, 1, 1], [], []>} : vector<2x32xf32>, vector<32x8xf32>, vector<2x8xf32> -> vector<2x8xf32>
    %c0_3 = arith.constant 0 : index
    %c0_4 = arith.constant 0 : index
    %3 = vector.load %arg3[%c0_3, %c0_4] : memref<1x8xf32, #tpu.memory_space<vmem>>, vector<1x8xf32>
    %4 = vector.broadcast %3 : vector<1x8xf32> to vector<2x8xf32>
    %5 = arith.addf %2, %4 : vector<2x8xf32>
    %cst_5 = arith.constant 0.000000e+00 : f32
    %6 = vector.broadcast %cst_5 : f32 to vector<2x8xf32>
    %7 = arith.maximumf %5, %6 : vector<2x8xf32>
    %c0_6 = arith.constant 0 : index
    %c0_7 = arith.constant 0 : index
    %8 = vector.load %arg4[%c0_6, %c0_7] : memref<2x8xf32, #tpu.memory_space<vmem>>, vector<2x8xf32>
    tpu.vector_store %arg4[%c0_6, %c0_7], %7 {strides = array<i32>} : memref<2x8xf32, #tpu.memory_space<vmem>>, vector<2x8xf32>,
    return
  }
  func.func @transform_0(%arg0: i32) -> (i32, i32) {
    %c0_i32 = arith.constant 0 : i32
    %c0_i32_0 = arith.constant 0 : i32
    return %arg0, %c0_i32 : i32, i32
  }
  func.func @transform_1(%arg0: i32) -> (i32, i32) {
    %c0_i32 = arith.constant 0 : i32
    %c0_i32_0 = arith.constant 0 : i32
    %c0_i32_1 = arith.constant 0 : i32
    return %c0_i32, %c0_i32_0 : i32, i32
  }
  func.func @transform_2(%arg0: i32) -> (i32, i32) {
    %c0_i32 = arith.constant 0 : i32
    %c0_i32_0 = arith.constant 0 : i32
    %c0_i32_1 = arith.constant 0 : i32
    return %c0_i32, %c0_i32_0 : i32, i32
  }
  func.func @transform_3(%arg0: i32) -> (i32, i32) {
    %c0_i32 = arith.constant 0 : i32
    %c0_i32_0 = arith.constant 0 : i32
    return %arg0, %c0_i32 : i32, i32
  }
}

</mosaic_0001>

<llo_original>
// kernel: tpu_custom_call.1
$region0: #{tpu_custom_call.1}
  #allocation0 [shape = 'u32[]', space=smem, size = 0x4, offset = 0x4, fixed_abs, tag = 'smem constant byte address 0x4 - core index']
  #allocation1 [shape = 'u32[144,128]{1,0:T(1,128)}', space=vmem, size = 0x12000, scoped, tag = 'internal scratch']
  %s0 = inlined_call_operand.vmem [shape: f32[2,32], index: 0, kind: input, shape index: {}]
  %s1 = inlined_call_operand.vmem [shape: f32[32,8], index: 1, kind: input, shape index: {}]
  %s2 = inlined_call_operand.vmem [shape: f32[1,8], index: 2, kind: input, shape index: {}]
  %s3 = inlined_call_operand.hbm [shape: f32[2,8], index: 3, kind: output, shape index: {}]
  %s4 = sld [smem:[#allocation0]]
  $region22: #{tpu_custom_call.1} parent=0
    _
  %s6 = ssub.s32 1, %s4
  %s7 = scalar_select 0, %s6, %s4
  $region1: #{tpu_custom_call.1} parent=0
    #allocation2 [shape = 'u8[1024]{0}', space=vmem, size = 0x400, scoped, tag = 'output window, operand 0, single buffered']
    #allocation3 [shape = 's32[1]{0}', space=sflag, size = 0x4, scoped, tag = 'scoped memory for tpu_custom_call.1']
    %8 = vsyncpa [#allocation3], 0
    // Predicated region
    $region2: #{tpu_custom_call.1} parent=1 // pred_check
      _
    $region3: #{tpu_custom_call.1} parent=1 // pred_check_branch
      %10 = sbr.rel (0) target = $region5
    $region4: #{tpu_custom_call.1} parent=1 // pred_region
      _
    $region5: #{tpu_custom_call.1} parent=1 // pred_fallthru
      _
    // Predicated region
    $region6: #{tpu_custom_call.1} parent=1 // pred_check
      _
    $region7: #{tpu_custom_call.1} parent=1 // pred_check_branch
      %12 = sbr.rel (0) target = $region9
    $region8: #{tpu_custom_call.1} parent=1 // pred_region
      _
    $region9: #{tpu_custom_call.1} parent=1 // pred_fallthru
      _
    // Predicated region
    $region10: #{tpu_custom_call.1} parent=1 // pred_check
      _
    $region11: #{tpu_custom_call.1} parent=1 // pred_check_branch
      %14 = sbr.rel (0) target = $region13
    $region12: #{tpu_custom_call.1} parent=1 // pred_region
      _
    $region13: #{tpu_custom_call.1} parent=1 // pred_fallthru
      _
    %v15 = vld [vmem:[%s0] sm:$0x3]
    %v16 = vld [vmem:[%s1] sm:$0xff]
    %v17 = vld [vmem:[%s1 + $0x8] sm:$0xff]
    %v18 = vld [vmem:[%s1 + $0x10] sm:$0xff]
    %v19 = vld [vmem:[%s1 + $0x18] sm:$0xff]
    %v20 = vld [vmem:[%s2] sm:$0x1]
    %v22 = vlaneseq
    %v23 = vshrl.u32 %v22, 7
    %v24 = vsub.s32 0, %v23
    %v25 = vrot.slane %v20, %v24
    %vm27 = vcmask 261120
    %v29 = vsel %vm27, %v15, 0
    %31 = vmatprep.subr.mxu0 0.0
    %32 = vmatpush1.msra.mxu0 %v16
    %33 = vmatprep.subr.mxu0 0.0
    %34 = vmatpush1.msra.mxu0 %v17
    %35 = vmatprep.subr.mxu0 0.0
    %36 = vmatpush1.msra.mxu0 %v18
    %37 = vmatprep.subr.mxu0 0.0
    %38 = vmatpush1.msra.mxu0 %v19
    %39 = vmatprep.subr.mxu0 0.0
    %40 = vmatpush1.msra.mxu0 0.0
    %41 = vmatprep.subr.mxu0 0.0
    %42 = vmatpush1.msra.mxu0 0.0
    %43 = vmatprep.subr.mxu0 0.0
    %44 = vmatpush1.msra.mxu0 0.0
    %45 = vmatprep.subr.mxu0 0.0
    %46 = vmatpush1.msra.mxu0 0.0
    %47 = vmatprep.subr.mxu0 0.0
    %48 = vmatpush1.msra.mxu0 0.0
    %49 = vmatprep.subr.mxu0 0.0
    %50 = vmatpush1.msra.mxu0 0.0
    %51 = vmatprep.subr.mxu0 0.0
    %52 = vmatpush1.msra.mxu0 0.0
    %53 = vmatprep.subr.mxu0 0.0
    %54 = vmatpush1.msra.mxu0 0.0
    %55 = vmatprep.subr.mxu0 0.0
    %56 = vmatpush1.msra.mxu0 0.0
    %57 = vmatprep.subr.mxu0 0.0
    %58 = vmatpush1.msra.mxu0 0.0
    %59 = vmatprep.subr.mxu0 0.0
    %60 = vmatpush1.msra.mxu0 0.0
    %61 = vmatprep.subr.mxu0 0.0
    %62 = vmatpush1.msra.mxu0 0.0
    %63 = vmatprep.subr.mxu0 0.0
    %64 = vmatpush1.msra.mxu0 0.0
    %65 = vmatprep.subr.mxu0 0.0
    %66 = vmatpush1.msra.mxu0 0.0
    %67 = vmatprep.subr.mxu0 0.0
    %68 = vmatpush1.msra.mxu0 0.0
    %69 = vmatprep.subr.mxu0 0.0
    %70 = vmatpush1.msra.mxu0 0.0
    %71 = vmatprep.subr.mxu0 0.0
    %72 = vmatpush1.msra.mxu0 0.0
    %73 = vmatprep.subr.mxu0 0.0
    %74 = vmatpush1.msra.mxu0 0.0
    %75 = vmatprep.subr.mxu0 0.0
    %76 = vmatpush1.msra.mxu0 0.0
    %77 = vmatprep.subr.mxu0 0.0
    %78 = vmatpush1.msra.mxu0 0.0
    %79 = vmatprep.subr.mxu0 0.0
    %80 = vmatpush1.msra.mxu0 0.0
    %81 = vmatprep.subr.mxu0 0.0
    %82 = vmatpush1.msra.mxu0 0.0
    %83 = vmatprep.subr.mxu0 0.0
    %84 = vmatpush1.msra.mxu0 0.0
    %85 = vmatprep.subr.mxu0 0.0
    %86 = vmatpush1.msra.mxu0 0.0
    %87 = vmatprep.subr.mxu0 0.0
    %88 = vmatpush1.msra.mxu0 0.0
    %89 = vmatprep.subr.mxu0 0.0
    %90 = vmatpush1.msra.mxu0 0.0
    %91 = vmatprep.subr.mxu0 0.0
    %92 = vmatpush1.msra.mxu0 0.0
    %93 = vmatprep.subr.mxu0 0.0
    %94 = vmatpush1.msra.mxu0 0.0
    %95 = vmatprep.mubr.f32.mxu0 0.0
    %96 = vmatmul.mubr.f32.gmra.mrb[0].mxu0 %v29
    %v97 = vpop.f32.mrb[0].mxu0
    %v98 = vadd.f32 %v25, %v97
    %v99 = vpop.f32.mrb[0].mxu0
    %100 = vdwg.mxu0
    %v101 = vmax.f32 %v98, 0.0
    %vm102 = vcmask 58368
    %103 = vst.msk [vmem:[#allocation2] sm:$0x3] %vm102, %v101
    // Predicated region
    $region14: #{tpu_custom_call.1} parent=1 // pred_check
      _
    $region15: #{tpu_custom_call.1} parent=1 // pred_check_branch
      %105 = sbr.rel (0) target = $region17
    $region16: #{tpu_custom_call.1} parent=1 // pred_region
      %s107 = ssub.s32 32, 32
      %108 = vsyncadd [#allocation3], %s107
      %s110 = sshll.u32 [#allocation2], 4
      %s111 = int_to_ptr.vmem [resolvable:$true] %s110
      %113 = dma.vmem_to_hbm [thread:$0]  %s111, 32, %s3, [#allocation3]
    $region17: #{tpu_custom_call.1} parent=1 // pred_fallthru
      _
    // Predicated region
    $region18: #{tpu_custom_call.1} parent=1 // pred_check
      _
    $region19: #{tpu_custom_call.1} parent=1 // pred_check_branch
      %115 = sbr.rel (0) target = $region21
    $region20: #{tpu_custom_call.1} parent=1 // pred_region
      %116 = dma.done [#allocation3], 32
    $region21: #{tpu_custom_call.1} parent=1 // pred_fallthru
      _
    %117 = vsyncpa [#allocation3], 1

</llo_original>
